<compile_context>
chip_gen: v5e
topology: v5e:2x2
jax: 0.10.0
libtpu: 0.0.40
codegen_flags: <defaults>
</compile_context>

<pallas_src>
import jax
import jax.numpy as jnp
from jax.experimental import pallas as pl
from jax.experimental.pallas import tpu as pltpu

LEAKY_SLOPE = 0.01          # torch.nn.LeakyReLU default negative_slope
SINGLE_TILE_MAX = 2048      # below this, run the whole batch in one grid step
LARGE_TILE_B = 1024         # batch tile for population-scale batches


def _round_up(x, m):
    return (x + m - 1) // m * m


def _make_mlp_kernel(n_linear: int):
    """Kernel for an MLP with `n_linear` Linear layers, feature-major layout.

    Ref order: x_t, W1, b1, ..., Wn, bn, out_t
      x_t:   (sensors_pad, tile_b)   -- batch on the lane axis
      Wi:    (out_dim, in_dim)       -- torch layout, used directly
      bi:    (out_dim, 1)
      out_t: (actuators, tile_b)
    All matmuls (MXU) + LeakyReLU (VPU) run inside the kernel.
    """

    def kernel(*refs):
        x_ref = refs[0]
        out_ref = refs[-1]
        params = refs[1:-1]

        h = x_ref[...]                                  # (in_dim, tile_b) f32
        for li in range(n_linear):
            w = params[2 * li][...]
            b = params[2 * li + 1][...]
            h = jnp.dot(w, h, preferred_element_type=jnp.float32) + b
            if li < n_linear - 1:
                # LeakyReLU: max(h, slope*h) == where(h>0, h, slope*h), slope<1
                h = jnp.maximum(h, LEAKY_SLOPE * h)
        out_ref[...] = h.astype(out_ref.dtype)

    return kernel


def prepare_params(weights, biases):
    """One-time layout prep: validate torch-layout params, pad layer-0 in_dim.

    weights: list of (out_dim, in_dim) float32 arrays (torch nn.Linear layout)
    biases:  list of (out_dim,) float32 arrays
    Returns a flat tuple (W1, b1, ..., Wn, bn) ready for the kernel, with the
    first layer's in_dim zero-padded to a multiple of 8 (sublane alignment).
    Call this once and reuse the result for every forward call.
    """
    n_linear = len(weights)
    assert len(biases) == n_linear and n_linear >= 1

    # Shape validation: catch callers passing (in_dim, out_dim) weights.
    for li in range(n_linear):
        out_d, in_d = weights[li].shape
        assert biases[li].shape == (out_d,), (
            f"layer {li}: bias shape {biases[li].shape} != ({out_d},); "
            "weights must be torch-layout (out_dim, in_dim)")
        if li > 0:
            assert in_d == weights[li - 1].shape[0], (
                f"layer {li}: in_dim {in_d} != previous out_dim "
                f"{weights[li - 1].shape[0]}")

    sensors = weights[0].shape[1]
    sensors_pad = max(_round_up(sensors, 8), 8)

    flat = []
    for li, (w, b) in enumerate(zip(weights, biases)):
        w = jnp.asarray(w, jnp.float32)
        b = jnp.asarray(b, jnp.float32)
        if li == 0 and sensors_pad != sensors:
            w = (jnp.zeros((w.shape[0], sensors_pad), jnp.float32)
                 .at[:, :sensors].set(w))
        flat.extend((w, b.reshape(-1, 1)))
    return tuple(flat)


@jax.jit
def policy_network_forward(x, prepared_params):
    """Forward pass.  x: (batch, sensors) f32 -> (batch, actuators) f32."""
    flat_params = prepared_params
    n_linear = len(flat_params) // 2

    batch, sensors = x.shape
    sensors_pad = flat_params[0].shape[1]      # padded in_dim of layer 0
    actuators = flat_params[-2].shape[0]
    assert sensors <= sensors_pad

    # Batch tiling: one grid step for small batches; 1024-row tiles with an
    # even step count (balanced across v7x's 2 TCs) for population batches.
    batch_pad = max(_round_up(batch, 128), 128)
    if batch_pad <= SINGLE_TILE_MAX:
        tile_b = batch_pad
        n_tiles = 1
    else:
        tile_b = LARGE_TILE_B
        n_tiles = _round_up(pl.cdiv(batch_pad, tile_b), 2)
        batch_pad = n_tiles * tile_b

    # Feature-major, zero-padded input; fuses with the surrounding jit.
    x_t = (jnp.zeros((sensors_pad, batch_pad), jnp.float32)
           .at[:sensors, :batch].set(x.T.astype(jnp.float32)))

    kernel = _make_mlp_kernel(n_linear)

    # x/out are tiled over the batch (lane) axis; weights/biases use constant
    # index_maps so they stay VMEM-resident across grid steps.
    # (pipeline_mode=pl.Buffered(1) would also drop the dead second param
    #  buffer, but at ~10 KB of f32 params it is irrelevant here.)
    in_specs = [pl.BlockSpec((sensors_pad, tile_b), lambda i: (0, i))]
    for p in flat_params:
        in_specs.append(pl.BlockSpec(p.shape, lambda i: (0, 0)))
    out_specs = pl.BlockSpec((actuators, tile_b), lambda i: (0, i))

    out_t = pl.pallas_call(
        kernel,
        out_shape=jax.ShapeDtypeStruct((actuators, batch_pad), jnp.float32),
        grid=(n_tiles,),
        in_specs=in_specs,
        out_specs=out_specs,
        compiler_params=pltpu.CompilerParams(
            dimension_semantics=("parallel",),   # v7x: shard batch over 2 TCs
        ),
    )(x_t, *flat_params)

    # Un-transpose and drop batch padding (fused into the same jit).
    return out_t.T[:batch, :]


def init_policy_params(key, sensors, actuators, n_hidden_layers, layer_size):
    """Deterministic synthetic init matching torch nn.Linear layout & scale.

    Returns torch-layout weights [(out_dim, in_dim)] and biases [(out_dim,)].
    """
    assert n_hidden_layers > 0
    dims = [sensors] + [layer_size] * n_hidden_layers + [actuators]
    weights, biases = [], []
    for i in range(len(dims) - 1):
        in_d, out_d = dims[i], dims[i + 1]
        key, kw, kb = jax.random.split(key, 3)
        bound = 1.0 / jnp.sqrt(jnp.float32(in_d))
        w = jax.random.uniform(kw, (out_d, in_d), jnp.float32, -bound, bound)
        b = jax.random.uniform(kb, (out_d,), jnp.float32, -bound, bound)
        weights.append(w)
        biases.append(b)
    return weights, biases


def policy_network_ref(x, weights, biases):
    """Plain-JAX reference (torch-layout params) for verification."""
    h = x
    for i, (w, b) in enumerate(zip(weights, biases)):
        h = h @ w.T + b
        if i < len(weights) - 1:
            h = jnp.where(h > 0, h, LEAKY_SLOPE * h)
    return h


if __name__ == "__main__":
    # Cartpole: 4 sensors (x, x_dot, theta, theta_dot), 1 actuator (force).
    SENSORS = 4
    ACTUATORS = 1
    N_HIDDEN_LAYERS = 2
    LAYER_SIZE = 32
    BATCH = 256   # small batch -> single grid step, no per-step overhead

    key = jax.random.PRNGKey(0)
    key, kx = jax.random.split(key)
    x = jax.random.normal(kx, (BATCH, SENSORS), dtype=jnp.float32)

    weights, biases = init_policy_params(
        key, SENSORS, ACTUATORS, N_HIDDEN_LAYERS, LAYER_SIZE
    )

    prepared = prepare_params(weights, biases)   # one-time padding/layout prep
    out = policy_network_forward(x, prepared)
    out = jax.block_until_ready(out)

    ref = policy_network_ref(x, weights, biases)
    assert out.shape == (BATCH, ACTUATORS)
    max_err = jnp.max(jnp.abs(out - ref))
    assert jnp.allclose(out, ref, atol=1e-5, rtol=1e-5), (
        f"mismatch: max abs err = {max_err}"
    )

    print("KERNEL_OK")
</pallas_src>

<mosaic_0001>
module attributes {stable_mosaic.version = 11 : i64} {
  func.func @kernel(%arg0: i32, %arg1: memref<8x256xf32, #tpu.memory_space<vmem>>, %arg2: memref<32x8xf32, #tpu.memory_space<vmem>>, %arg3: memref<32x1xf32, #tpu.memory_space<vmem>>, %arg4: memref<32x32xf32, #tpu.memory_space<vmem>>, %arg5: memref<32x1xf32, #tpu.memory_space<vmem>>, %arg6: memref<1x32xf32, #tpu.memory_space<vmem>>, %arg7: memref<1x1xf32, #tpu.memory_space<vmem>>, %arg8: memref<1x256xf32, #tpu.memory_space<vmem>>) attributes {dimension_semantics = [#tpu.dimension_semantics<parallel>], iteration_bounds = array<i64: 1>, scalar_prefetch = 0 : i64, scratch_operands = 0 : i64, tpu.core_type = #tpu.core_type<tc>, window_params = [{transform_indices = @transform_0, window_bounds = array<i64: 8, 256>}, {pipeline_mode = #tpu.pipeline_mode<synchronous>, transform_indices = @transform_1, window_bounds = array<i64: 32, 8>}, {pipeline_mode = #tpu.pipeline_mode<synchronous>, transform_indices = @transform_2, window_bounds = array<i64: 32, 1>}, {pipeline_mode = #tpu.pipeline_mode<synchronous>, transform_indices = @transform_3, window_bounds = array<i64: 32, 32>}, {pipeline_mode = #tpu.pipeline_mode<synchronous>, transform_indices = @transform_4, window_bounds = array<i64: 32, 1>}, {pipeline_mode = #tpu.pipeline_mode<synchronous>, transform_indices = @transform_5, window_bounds = array<i64: 1, 32>}, {pipeline_mode = #tpu.pipeline_mode<synchronous>, transform_indices = @transform_6, window_bounds = array<i64: 1, 1>}, {transform_indices = @transform_7, window_bounds = array<i64: 1, 256>}]} {
    %c0 = arith.constant 0 : index
    %c0_0 = arith.constant 0 : index
    %0 = vector.load %arg1[%c0, %c0_0] : memref<8x256xf32, #tpu.memory_space<vmem>>, vector<8x256xf32>
    %c0_1 = arith.constant 0 : index
    %c0_2 = arith.constant 0 : index
    %1 = vector.load %arg2[%c0_1, %c0_2] : memref<32x8xf32, #tpu.memory_space<vmem>>, vector<32x8xf32>
    %c0_3 = arith.constant 0 : index
    %c0_4 = arith.constant 0 : index
    %2 = vector.load %arg3[%c0_3, %c0_4] : memref<32x1xf32, #tpu.memory_space<vmem>>, vector<32x1xf32>
    %cst = arith.constant dense<0.000000e+00> : vector<32x256xf32>
    %3 = tpu.matmul %1, %0, %cst {dimension_numbers = #tpu.dot_dimension_numbers<[1], [0], [0], [1], [0, 0, 1, 1], [], []>} : vector<32x8xf32>, vector<8x256xf32>, vector<32x256xf32> -> vector<32x256xf32>
    %4 = vector.broadcast %2 : vector<32x1xf32> to vector<32x256xf32>
    %5 = arith.addf %3, %4 : vector<32x256xf32>
    %cst_5 = arith.constant 0.00999999977 : f32
    %6 = vector.broadcast %cst_5 : f32 to vector<32x256xf32>
    %7 = arith.mulf %6, %5 : vector<32x256xf32>
    %8 = arith.maximumf %5, %7 : vector<32x256xf32>
    %c0_6 = arith.constant 0 : index
    %c0_7 = arith.constant 0 : index
    %9 = vector.load %arg4[%c0_6, %c0_7] : memref<32x32xf32, #tpu.memory_space<vmem>>, vector<32x32xf32>
    %c0_8 = arith.constant 0 : index
    %c0_9 = arith.constant 0 : index
    %10 = vector.load %arg5[%c0_8, %c0_9] : memref<32x1xf32, #tpu.memory_space<vmem>>, vector<32x1xf32>
    %cst_10 = arith.constant dense<0.000000e+00> : vector<32x256xf32>
    %11 = tpu.matmul %9, %8, %cst_10 {dimension_numbers = #tpu.dot_dimension_numbers<[1], [0], [0], [1], [0, 0, 1, 1], [], []>} : vector<32x32xf32>, vector<32x256xf32>, vector<32x256xf32> -> vector<32x256xf32>
    %12 = vector.broadcast %10 : vector<32x1xf32> to vector<32x256xf32>
    %13 = arith.addf %11, %12 : vector<32x256xf32>
    %cst_11 = arith.constant 0.00999999977 : f32
    %14 = vector.broadcast %cst_11 : f32 to vector<32x256xf32>
    %15 = arith.mulf %14, %13 : vector<32x256xf32>
    %16 = arith.maximumf %13, %15 : vector<32x256xf32>
    %c0_12 = arith.constant 0 : index
    %c0_13 = arith.constant 0 : index
    %17 = vector.load %arg6[%c0_12, %c0_13] : memref<1x32xf32, #tpu.memory_space<vmem>>, vector<1x32xf32>
    %c0_14 = arith.constant 0 : index
    %c0_15 = arith.constant 0 : index
    %18 = vector.load %arg7[%c0_14, %c0_15] : memref<1x1xf32, #tpu.memory_space<vmem>>, vector<1x1xf32>
    %cst_16 = arith.constant dense<0.000000e+00> : vector<1x256xf32>
    %19 = tpu.matmul %17, %16, %cst_16 {dimension_numbers = #tpu.dot_dimension_numbers<[1], [0], [0], [1], [0, 0, 1, 1], [], []>} : vector<1x32xf32>, vector<32x256xf32>, vector<1x256xf32> -> vector<1x256xf32>
    %20 = vector.broadcast %18 : vector<1x1xf32> to vector<1x256xf32>
    %21 = arith.addf %19, %20 : vector<1x256xf32>
    %c0_17 = arith.constant 0 : index
    %c0_18 = arith.constant 0 : index
    %22 = vector.load %arg8[%c0_17, %c0_18] : memref<1x256xf32, #tpu.memory_space<vmem>>, vector<1x256xf32>
    tpu.vector_store %arg8[%c0_17, %c0_18], %21 {strides = array<i32>} : memref<1x256xf32, #tpu.memory_space<vmem>>, vector<1x256xf32>,
    return
  }
  func.func @transform_0(%arg0: i32) -> (i32, i32) {
    %c0_i32 = arith.constant 0 : i32
    %c0_i32_0 = arith.constant 0 : i32
    return %c0_i32, %arg0 : i32, i32
  }
  func.func @transform_1(%arg0: i32) -> (i32, i32) {
    %c0_i32 = arith.constant 0 : i32
    %c0_i32_0 = arith.constant 0 : i32
    %c0_i32_1 = arith.constant 0 : i32
    return %c0_i32, %c0_i32_0 : i32, i32
  }
  func.func @transform_2(%arg0: i32) -> (i32, i32) {
    %c0_i32 = arith.constant 0 : i32
    %c0_i32_0 = arith.constant 0 : i32
    %c0_i32_1 = arith.constant 0 : i32
    return %c0_i32, %c0_i32_0 : i32, i32
  }
  func.func @transform_3(%arg0: i32) -> (i32, i32) {
    %c0_i32 = arith.constant 0 : i32
    %c0_i32_0 = arith.constant 0 : i32
    %c0_i32_1 = arith.constant 0 : i32
    return %c0_i32, %c0_i32_0 : i32, i32
  }
  func.func @transform_4(%arg0: i32) -> (i32, i32) {
    %c0_i32 = arith.constant 0 : i32
    %c0_i32_0 = arith.constant 0 : i32
    %c0_i32_1 = arith.constant 0 : i32
    return %c0_i32, %c0_i32_0 : i32, i32
  }
  func.func @transform_5(%arg0: i32) -> (i32, i32) {
    %c0_i32 = arith.constant 0 : i32
    %c0_i32_0 = arith.constant 0 : i32
    %c0_i32_1 = arith.constant 0 : i32
    return %c0_i32, %c0_i32_0 : i32, i32
  }
  func.func @transform_6(%arg0: i32) -> (i32, i32) {
    %c0_i32 = arith.constant 0 : i32
    %c0_i32_0 = arith.constant 0 : i32
    %c0_i32_1 = arith.constant 0 : i32
    return %c0_i32, %c0_i32_0 : i32, i32
  }
  func.func @transform_7(%arg0: i32) -> (i32, i32) {
    %c0_i32 = arith.constant 0 : i32
    %c0_i32_0 = arith.constant 0 : i32
    return %c0_i32, %arg0 : i32, i32
  }
}

</mosaic_0001>

<llo_original>
// kernel: policy_network_forward.1
$region0: #{policy_network_forward.1}
  #allocation0 [shape = 'u32[]', space=smem, size = 0x4, offset = 0x4, fixed_abs, tag = 'smem constant byte address 0x4 - core index']
  #allocation1 [shape = 'u32[72,128]{1,0:T(1,128)}', space=vmem, size = 0x9000, scoped, tag = 'internal scratch']
  #allocation2 [shape = 'f32[1,1]{1,0:T(1,128)S(1)}', space=vmem, size = 0x200, scoped, tag = 'scoped memory for policy_network_forward.1']
  %s0 = inlined_call_operand.vmem [shape: f32[8,256], index: 0, kind: input, shape index: {}]
  %s1 = inlined_call_operand.vmem [shape: f32[32,8], index: 1, kind: input, shape index: {}]
  %s2 = inlined_call_operand.vmem [shape: f32[32,1], index: 2, kind: input, shape index: {}]
  %s3 = inlined_call_operand.vmem [shape: f32[32,32], index: 3, kind: input, shape index: {}]
  %s4 = inlined_call_operand.vmem [shape: f32[32,1], index: 4, kind: input, shape index: {}]
  %s5 = inlined_call_operand.vmem [shape: f32[1,32], index: 5, kind: input, shape index: {}]
  %s6 = inlined_call_operand.<no memory space> [shape: f32[1,1], index: 6, kind: input, shape index: {}]
  %s7 = inlined_call_operand.hbm [shape: f32[1,256], index: 7, kind: output, shape index: {}]
  %s8 = sld [smem:[#allocation0]]
  $region38: #{policy_network_forward.1} parent=0
    _
  %s10 = ssub.s32 1, %s8
  %s11 = scalar_select 0, %s10, %s8
  %v12 = vstv %s6
  %13 = vst [vmem:[#allocation2] sm:$0x1] %v12
  $region1: #{policy_network_forward.1} parent=0
    #allocation3 [shape = 'u8[1024]{0}', space=vmem, size = 0x400, scoped, tag = 'output window, operand 0, single buffered']
    #allocation4 [shape = 's32[1]{0}', space=sflag, size = 0x4, scoped, tag = 'scoped memory for policy_network_forward.1']
    %14 = vsyncpa [#allocation4], 0
    // Predicated region
    $region2: #{policy_network_forward.1} parent=1 // pred_check
      _
    $region3: #{policy_network_forward.1} parent=1 // pred_check_branch
      %16 = sbr.rel (0) target = $region5
    $region4: #{policy_network_forward.1} parent=1 // pred_region
      _
    $region5: #{policy_network_forward.1} parent=1 // pred_fallthru
      _
    // Predicated region
    $region6: #{policy_network_forward.1} parent=1 // pred_check
      _
    $region7: #{policy_network_forward.1} parent=1 // pred_check_branch
      %18 = sbr.rel (0) target = $region9
    $region8: #{policy_network_forward.1} parent=1 // pred_region
      _
    $region9: #{policy_network_forward.1} parent=1 // pred_fallthru
      _
    // Predicated region
    $region10: #{policy_network_forward.1} parent=1 // pred_check
      _
    $region11: #{policy_network_forward.1} parent=1 // pred_check_branch
      %20 = sbr.rel (0) target = $region13
    $region12: #{policy_network_forward.1} parent=1 // pred_region
      _
    $region13: #{policy_network_forward.1} parent=1 // pred_fallthru
      _
    // Predicated region
    $region14: #{policy_network_forward.1} parent=1 // pred_check
      _
    $region15: #{policy_network_forward.1} parent=1 // pred_check_branch
      %22 = sbr.rel (0) target = $region17
    $region16: #{policy_network_forward.1} parent=1 // pred_region
      _
    $region17: #{policy_network_forward.1} parent=1 // pred_fallthru
      _
    // Predicated region
    $region18: #{policy_network_forward.1} parent=1 // pred_check
      _
    $region19: #{policy_network_forward.1} parent=1 // pred_check_branch
      %24 = sbr.rel (0) target = $region21
    $region20: #{policy_network_forward.1} parent=1 // pred_region
      _
    $region21: #{policy_network_forward.1} parent=1 // pred_fallthru
      _
    // Predicated region
    $region22: #{policy_network_forward.1} parent=1 // pred_check
      _
    $region23: #{policy_network_forward.1} parent=1 // pred_check_branch
      %26 = sbr.rel (0) target = $region25
    $region24: #{policy_network_forward.1} parent=1 // pred_region
      _
    $region25: #{policy_network_forward.1} parent=1 // pred_fallthru
      _
    // Predicated region
    $region26: #{policy_network_forward.1} parent=1 // pred_check
      _
    $region27: #{policy_network_forward.1} parent=1 // pred_check_branch
      %28 = sbr.rel (0) target = $region29
    $region28: #{policy_network_forward.1} parent=1 // pred_region
      _
    $region29: #{policy_network_forward.1} parent=1 // pred_fallthru
      _
    %v29 = vld [vmem:[%s0] sm:$0xff]
    %v30 = vld [vmem:[%s0 + $0x8] sm:$0xff]
    %v31 = vld [vmem:[%s1] sm:$0xff]
    %v32 = vld [vmem:[%s1 + $0x8] sm:$0xff]
    %v33 = vld [vmem:[%s1 + $0x10] sm:$0xff]
    %v34 = vld [vmem:[%s1 + $0x18] sm:$0xff]
    %v35 = vld [vmem:[%s2] sm:$0xff]
    %v36 = vld [vmem:[%s2 + $0x8] sm:$0xff]
    %v37 = vld [vmem:[%s2 + $0x10] sm:$0xff]
    %v38 = vld [vmem:[%s2 + $0x18] sm:$0xff]
    %40 = vset.pattern.permute.xlu0 0
    %41 = vperm.xlu0 %40, %v35
    %v42 = vpop.permute.xlu0 %41
    %45 = vset.pattern.permute.xlu0 0
    %46 = vperm.xlu0 %45, %v36
    %v47 = vpop.permute.xlu0 %46
    %50 = vset.pattern.permute.xlu0 0
    %51 = vperm.xlu0 %50, %v37
    %v52 = vpop.permute.xlu0 %51
    %55 = vset.pattern.permute.xlu0 0
    %56 = vperm.xlu0 %55, %v38
    %v57 = vpop.permute.xlu0 %56
    %vm59 = vcmask 64512
    %v61 = vsel %vm59, %v31, 0
    %v64 = vsel %vm59, %v32, 0
    %v67 = vsel %vm59, %v33, 0
    %v70 = vsel %vm59, %v34, 0
    %72 = vmatpush.msra.mxu0 0.0
    %73 = vmatpush.msra.mxu0 0.0
    %74 = vmatpush.msra.mxu0 0.0
    %75 = vmatpush.msra.mxu0 0.0
    %76 = vmatpush.msra.mxu0 0.0
    %77 = vmatpush.msra.mxu0 0.0
    %78 = vmatpush.msra.mxu0 0.0
    %79 = vmatpush.msra.mxu0 0.0
    %80 = vmatpush.msra.mxu0 0.0
    %81 = vmatpush.msra.mxu0 0.0
    %82 = vmatpush.msra.mxu0 0.0
    %83 = vmatpush.msra.mxu0 0.0
    %84 = vmatpush.msra.mxu0 0.0
    %85 = vmatpush.msra.mxu0 0.0
    %86 = vmatpush.msra.mxu0 0.0
    %87 = vmatpush.msra.mxu0 %v29
    %88 = vmatmul.f32.gmra.mxu0 %v61
    %v89 = vpop.f32.mrf.mxu0
    %v90 = vadd.f32 %v42, %v89
    %91 = vmatmul.f32.gmra.mxu0 %v64
    %v92 = vpop.f32.mrf.mxu0
    %v93 = vadd.f32 %v47, %v92
    %94 = vmatmul.f32.gmra.mxu0 %v67
    %v95 = vpop.f32.mrf.mxu0
    %v96 = vadd.f32 %v52, %v95
    %97 = vmatmul.f32.gmra.mxu0 %v70
    %v98 = vpop.f32.mrf.mxu0
    %v99 = vadd.f32 %v57, %v98
    %100 = vdwg.mxu0
    %101 = vmatpush.msra.mxu0 0.0
    %102 = vmatpush.msra.mxu0 0.0
    %103 = vmatpush.msra.mxu0 0.0
    %104 = vmatpush.msra.mxu0 0.0
    %105 = vmatpush.msra.mxu0 0.0
    %106 = vmatpush.msra.mxu0 0.0
    %107 = vmatpush.msra.mxu0 0.0
    %108 = vmatpush.msra.mxu0 0.0
    %109 = vmatpush.msra.mxu0 0.0
    %110 = vmatpush.msra.mxu0 0.0
    %111 = vmatpush.msra.mxu0 0.0
    %112 = vmatpush.msra.mxu0 0.0
    %113 = vmatpush.msra.mxu0 0.0
    %114 = vmatpush.msra.mxu0 0.0
    %115 = vmatpush.msra.mxu0 0.0
    %116 = vmatpush.msra.mxu0 %v30
    %117 = vmatmul.f32.gmra.mxu0 %v61
    %v118 = vpop.f32.mrf.mxu0
    %v119 = vadd.f32 %v42, %v118
    %120 = vmatmul.f32.gmra.mxu0 %v64
    %v121 = vpop.f32.mrf.mxu0
    %v122 = vadd.f32 %v47, %v121
    %123 = vmatmul.f32.gmra.mxu0 %v67
    %v124 = vpop.f32.mrf.mxu0
    %v125 = vadd.f32 %v52, %v124
    %126 = vmatmul.f32.gmra.mxu0 %v70
    %v127 = vpop.f32.mrf.mxu0
    %v128 = vadd.f32 %v57, %v127
    %129 = vdwg.mxu0
    %v130 = vmul.f32 %v90, 0.01
    %v131 = vmul.f32 %v119, 0.01
    %v132 = vmul.f32 %v93, 0.01
    %v133 = vmul.f32 %v122, 0.01
    %v134 = vmul.f32 %v96, 0.01
    %v135 = vmul.f32 %v125, 0.01
    %v136 = vmul.f32 %v99, 0.01
    %v137 = vmul.f32 %v128, 0.01
    %v138 = vmax.f32 %v90, %v130
    %v139 = vmax.f32 %v119, %v131
    %v140 = vmax.f32 %v93, %v132
    %v141 = vmax.f32 %v122, %v133
    %v142 = vmax.f32 %v96, %v134
    %v143 = vmax.f32 %v125, %v135
    %v144 = vmax.f32 %v99, %v136
    %v145 = vmax.f32 %v128, %v137
    %v146 = vld [vmem:[%s3] sm:$0xff]
    %v147 = vld [vmem:[%s3 + $0x8] sm:$0xff]
    %v148 = vld [vmem:[%s3 + $0x10] sm:$0xff]
    %v149 = vld [vmem:[%s3 + $0x18] sm:$0xff]
    %v150 = vld [vmem:[%s4] sm:$0xff]
    %v151 = vld [vmem:[%s4 + $0x8] sm:$0xff]
    %v152 = vld [vmem:[%s4 + $0x10] sm:$0xff]
    %v153 = vld [vmem:[%s4 + $0x18] sm:$0xff]
    %155 = vset.pattern.permute.xlu0 0
    %156 = vperm.xlu0 %155, %v150
    %v157 = vpop.permute.xlu0 %156
    %160 = vset.pattern.permute.xlu0 0
    %161 = vperm.xlu0 %160, %v151
    %v162 = vpop.permute.xlu0 %161
    %165 = vset.pattern.permute.xlu0 0
    %166 = vperm.xlu0 %165, %v152
    %v167 = vpop.permute.xlu0 %166
    %170 = vset.pattern.permute.xlu0 0
    %171 = vperm.xlu0 %170, %v153
    %v172 = vpop.permute.xlu0 %171
    %vm174 = vcmask 261120
    %v176 = vsel %vm174, %v146, 0
    %v179 = vsel %vm174, %v147, 0
    %v182 = vsel %vm174, %v148, 0
    %v185 = vsel %vm174, %v149, 0
    %187 = vmatpush.msra.mxu0 0.0
    %188 = vmatpush.msra.mxu0 0.0
    %189 = vmatpush.msra.mxu0 0.0
    %190 = vmatpush.msra.mxu0 0.0
    %191 = vmatpush.msra.mxu0 0.0
    %192 = vmatpush.msra.mxu0 0.0
    %193 = vmatpush.msra.mxu0 0.0
    %194 = vmatpush.msra.mxu0 0.0
    %195 = vmatpush.msra.mxu0 0.0
    %196 = vmatpush.msra.mxu0 0.0
    %197 = vmatpush.msra.mxu0 0.0
    %198 = vmatpush.msra.mxu0 0.0
    %199 = vmatpush.msra.mxu0 %v144
    %200 = vmatpush.msra.mxu0 %v142
    %201 = vmatpush.msra.mxu0 %v140
    %202 = vmatpush.msra.mxu0 %v138
    %203 = vmatmul.f32.gmra.mxu0 %v176
    %v204 = vpop.f32.mrf.mxu0
    %v205 = vadd.f32 %v157, %v204
    %206 = vmatmul.f32.gmra.mxu0 %v179
    %v207 = vpop.f32.mrf.mxu0
    %v208 = vadd.f32 %v162, %v207
    %209 = vmatmul.f32.gmra.mxu0 %v182
    %v210 = vpop.f32.mrf.mxu0
    %v211 = vadd.f32 %v167, %v210
    %212 = vmatmul.f32.gmra.mxu0 %v185
    %v213 = vpop.f32.mrf.mxu0
    %v214 = vadd.f32 %v172, %v213
    %215 = vdwg.mxu0
    %216 = vmatpush.msra.mxu0 0.0
    %217 = vmatpush.msra.mxu0 0.0
    %218 = vmatpush.msra.mxu0 0.0
    %219 = vmatpush.msra.mxu0 0.0
    %220 = vmatpush.msra.mxu0 0.0
    %221 = vmatpush.msra.mxu0 0.0
    %222 = vmatpush.msra.mxu0 0.0
    %223 = vmatpush.msra.mxu0 0.0
    %224 = vmatpush.msra.mxu0 0.0
    %225 = vmatpush.msra.mxu0 0.0
    %226 = vmatpush.msra.mxu0 0.0
    %227 = vmatpush.msra.mxu0 0.0
    %228 = vmatpush.msra.mxu0 %v145
    %229 = vmatpush.msra.mxu0 %v143
    %230 = vmatpush.msra.mxu0 %v141
    %231 = vmatpush.msra.mxu0 %v139
    %232 = vmatmul.f32.gmra.mxu0 %v176
    %v233 = vpop.f32.mrf.mxu0
    %v234 = vadd.f32 %v157, %v233
    %235 = vmatmul.f32.gmra.mxu0 %v179
    %v236 = vpop.f32.mrf.mxu0
    %v237 = vadd.f32 %v162, %v236
    %238 = vmatmul.f32.gmra.mxu0 %v182
    %v239 = vpop.f32.mrf.mxu0
    %v240 = vadd.f32 %v167, %v239
    %241 = vmatmul.f32.gmra.mxu0 %v185
    %v242 = vpop.f32.mrf.mxu0
    %v243 = vadd.f32 %v172, %v242
    %244 = vdwg.mxu0
    %v245 = vmul.f32 %v205, 0.01
    %v246 = vmul.f32 %v234, 0.01
    %v247 = vmul.f32 %v208, 0.01
    %v248 = vmul.f32 %v237, 0.01
    %v249 = vmul.f32 %v211, 0.01
    %v250 = vmul.f32 %v240, 0.01
    %v251 = vmul.f32 %v214, 0.01
    %v252 = vmul.f32 %v243, 0.01
    %v253 = vmax.f32 %v205, %v245
    %v254 = vmax.f32 %v234, %v246
    %v255 = vmax.f32 %v208, %v247
    %v256 = vmax.f32 %v237, %v248
    %v257 = vmax.f32 %v211, %v249
    %v258 = vmax.f32 %v240, %v250
    %v259 = vmax.f32 %v214, %v251
    %v260 = vmax.f32 %v243, %v252
    %v261 = vld [vmem:[%s5] sm:$0x1]
    %v262 = vld [vmem:[#allocation2] sm:$0x1]
    %264 = vset.pattern.permute.xlu0 0
    %265 = vperm.xlu0 %264, %v262
    %v266 = vpop.permute.xlu0 %265
    %v268 = vperm.slane %v266, 0
    %v270 = vsel %vm174, %v261, 0
    %272 = vmatpush.msra.mxu0 0.0
    %273 = vmatpush.msra.mxu0 0.0
    %274 = vmatpush.msra.mxu0 0.0
    %275 = vmatpush.msra.mxu0 0.0
    %276 = vmatpush.msra.mxu0 0.0
    %277 = vmatpush.msra.mxu0 0.0
    %278 = vmatpush.msra.mxu0 0.0
    %279 = vmatpush.msra.mxu0 0.0
    %280 = vmatpush.msra.mxu0 0.0
    %281 = vmatpush.msra.mxu0 0.0
    %282 = vmatpush.msra.mxu0 0.0
    %283 = vmatpush.msra.mxu0 0.0
    %284 = vmatpush.msra.mxu0 %v259
    %285 = vmatpush.msra.mxu0 %v257
    %286 = vmatpush.msra.mxu0 %v255
    %287 = vmatpush.msra.mxu0 %v253
    %288 = vmatmul.f32.gmra.mxu0 %v270
    %v289 = vpop.f32.mrf.mxu0
    %v290 = vadd.f32 %v268, %v289
    %291 = vdwg.mxu0
    %292 = vmatpush.msra.mxu0 0.0
    %293 = vmatpush.msra.mxu0 0.0
    %294 = vmatpush.msra.mxu0 0.0
    %295 = vmatpush.msra.mxu0 0.0
    %296 = vmatpush.msra.mxu0 0.0
    %297 = vmatpush.msra.mxu0 0.0
    %298 = vmatpush.msra.mxu0 0.0
    %299 = vmatpush.msra.mxu0 0.0
    %300 = vmatpush.msra.mxu0 0.0
    %301 = vmatpush.msra.mxu0 0.0
    %302 = vmatpush.msra.mxu0 0.0
    %303 = vmatpush.msra.mxu0 0.0
    %304 = vmatpush.msra.mxu0 %v260
    %305 = vmatpush.msra.mxu0 %v258
    %306 = vmatpush.msra.mxu0 %v256
    %307 = vmatpush.msra.mxu0 %v254
    %308 = vmatmul.f32.gmra.mxu0 %v270
    %v309 = vpop.f32.mrf.mxu0
    %v310 = vadd.f32 %v268, %v309
    %311 = vdwg.mxu0
    %v314 = vrot.slane %v310, 7
    %vm315 = vcmask 1040384
    %v316 = vsel %vm315, %v290, %v314
    %v318 = vlaneseq
    %vm319 = vcmp.ge.s32.totalorder %v318, 0
    %vm320 = vcmp.lt.s32.totalorder %v318, 256
    %vm321 = vmand %vm319, %vm320
    %322 = vst.msk [vmem:[#allocation3] sm:$0x3] %vm321, %v316
    // Predicated region
    $region30: #{policy_network_forward.1} parent=1 // pred_check
      _
    $region31: #{policy_network_forward.1} parent=1 // pred_check_branch
      %324 = sbr.rel (0) target = $region33
    $region32: #{policy_network_forward.1} parent=1 // pred_region
      %326 = vsyncadd [#allocation4], 0
      %s328 = sshll.u32 [#allocation3], 4
      %s329 = int_to_ptr.vmem [resolvable:$true] %s328
      %s330 = sshll.u32 %s7, 4
      %s331 = int_to_ptr.hbm [resolvable:$true] %s330
      %333 = dma.vmem_to_hbm [thread:$0]  %s329, 32, %s331, [#allocation4]
    $region33: #{policy_network_forward.1} parent=1 // pred_fallthru
      _
    // Predicated region
    $region34: #{policy_network_forward.1} parent=1 // pred_check
      _
    $region35: #{policy_network_forward.1} parent=1 // pred_check_branch
      %335 = sbr.rel (0) target = $region37
    $region36: #{policy_network_forward.1} parent=1 // pred_region
      %337 = dma.done [#allocation4], 32
    $region37: #{policy_network_forward.1} parent=1 // pred_fallthru
      _
    %338 = vsyncpa [#allocation4], 1

</llo_original>
